<compile_context>
chip_gen: v6e
topology: v6e:2x2x1
jax: 0.10.0
libtpu: 0.0.40
codegen_flags: <defaults>
</compile_context>

<pallas_src>
import functools

import jax
import jax.numpy as jnp
from jax.experimental import pallas as pl
from jax.experimental.pallas import tpu as pltpu


# ------------------------------ Pallas kernel ------------------------------

def bert_output_kernel(h_ref, w_ref, x_ref, p_ref, out_ref, *, eps):
    """One row tile per grid step.

    h_ref:   (tile_m, INTER) bf16  -- BertIntermediate activations
    w_ref:   (INTER, H)      bf16  -- dense weight (VMEM-resident, constant idx)
    x_ref:   (tile_m, H)           -- residual input (original dtype)
    p_ref:   (3, H)          f32   -- rows: [bias, gamma, beta]
    out_ref: (tile_m, H)
    """
    # bf16 MXU matmul, f32 accumulation.
    y = jnp.dot(h_ref[...], w_ref[...], preferred_element_type=jnp.float32)

    params = p_ref[...]
    bias = params[0:1, :]
    gamma = params[1:2, :]
    beta = params[2:3, :]

    # bias + residual in f32.
    y = y + bias + x_ref[...].astype(jnp.float32)

    # One-pass LayerNorm statistics: var = E[y^2] - mu^2 (all f32).
    mu = jnp.mean(y, axis=-1, keepdims=True)
    msq = jnp.mean(y * y, axis=-1, keepdims=True)
    var = msq - mu * mu
    inv = jax.lax.rsqrt(var + eps)  # EUP slot

    out_ref[...] = ((y - mu) * inv * gamma + beta).astype(out_ref.dtype)


# --------------------------------- wrapper ---------------------------------

def bert_output(hidden_states, input_tensor, weight, bias, gamma, beta,
                *, eps=1e-12, tile_m=512):
    """BertOutput forward.

    hidden_states: (B, S, INTER)   output of BertIntermediate
    input_tensor:  (B, S, H)       residual input
    weight:        (INTER, H)      == torch dense.weight.T
    bias, gamma, beta: (H,)
    """
    orig_shape = input_tensor.shape
    INTER, H = weight.shape
    out_dtype = input_tensor.dtype

    # Flatten rows and pre-cast the big matmul operands to bf16.
    h2 = hidden_states.reshape(-1, INTER).astype(jnp.bfloat16)
    x2 = input_tensor.reshape(-1, H)
    w_bf16 = weight.astype(jnp.bfloat16)
    M = h2.shape[0]

    # Pack bias / gamma / beta into one (3, H) f32 operand.
    params = jnp.stack(
        [bias.astype(jnp.float32),
         gamma.astype(jnp.float32),
         beta.astype(jnp.float32)], axis=0)

    # Row tile: cap at M, keep a multiple of 8 (sublane), pad rows if the
    # grid does not divide exactly (LayerNorm is per-row, padding is safe).
    tile_m = max(8, min(tile_m, M))
    tile_m = ((tile_m + 7) // 8) * 8
    num_tiles = pl.cdiv(M, tile_m)
    M_pad = num_tiles * tile_m
    if M_pad != M:
        h2 = jnp.pad(h2, ((0, M_pad - M), (0, 0)))
        x2 = jnp.pad(x2, ((0, M_pad - M), (0, 0)))

    grid = (num_tiles,)

    # Derive the VMEM budget from the actual working set (+50% headroom).
    def _nbytes(n_elems, dt):
        return int(n_elems) * jnp.dtype(dt).itemsize

    est = (2 * _nbytes(tile_m * INTER, jnp.bfloat16)      # h (double buffered)
           + 2 * _nbytes(tile_m * H, x2.dtype)            # residual
           + 2 * _nbytes(tile_m * H, out_dtype)           # output
           + 2 * _nbytes(INTER * H, jnp.bfloat16)         # weight
           + 2 * _nbytes(3 * H, jnp.float32))             # params
    vmem_limit = min(int(est * 1.5) + (4 << 20), 100 << 20)

    kernel = functools.partial(bert_output_kernel, eps=eps)

    out = pl.pallas_call(
        kernel,
        out_shape=jax.ShapeDtypeStruct((M_pad, H), out_dtype),
        grid=grid,
        in_specs=[
            pl.BlockSpec((tile_m, INTER), lambda i: (i, 0)),  # activations
            pl.BlockSpec((INTER, H), lambda i: (0, 0)),       # weight (resident)
            pl.BlockSpec((tile_m, H), lambda i: (i, 0)),      # residual
            pl.BlockSpec((3, H), lambda i: (0, 0)),           # bias/gamma/beta
        ],
        out_specs=pl.BlockSpec((tile_m, H), lambda i: (i, 0)),
        compiler_params=pltpu.CompilerParams(
            dimension_semantics=("parallel",),
            vmem_limit_bytes=vmem_limit,
        ),
    )(h2, w_bf16, x2, params)

    if M_pad != M:
        out = out[:M]
    return out.reshape(orig_shape)


# --------------------------- plain-JAX reference ---------------------------

def _ref_bert_output(hidden_states, input_tensor, weight, bias, gamma, beta,
                     eps=1e-12):
    y = hidden_states @ weight + bias + input_tensor
    mu = y.mean(-1, keepdims=True)
    var = ((y - mu) ** 2).mean(-1, keepdims=True)
    return (y - mu) / jnp.sqrt(var + eps) * gamma + beta


# ---------------------------------- main ----------------------------------

if __name__ == "__main__":
    # Small but lane-aligned shapes (H, INTER multiples of 128).
    B, S, H, INTER = 2, 128, 128, 512

    key = jax.random.PRNGKey(0)
    kh, kx, kw, kb, kg, kbe = jax.random.split(key, 6)

    hidden = jax.random.normal(kh, (B, S, INTER), jnp.float32)
    inp = jax.random.normal(kx, (B, S, H), jnp.float32)
    weight = 0.02 * jax.random.normal(kw, (INTER, H), jnp.float32)  # dense.weight.T
    bias = 0.02 * jax.random.normal(kb, (H,), jnp.float32)
    gamma = 1.0 + 0.1 * jax.random.normal(kg, (H,), jnp.float32)
    beta = 0.1 * jax.random.normal(kbe, (H,), jnp.float32)

    # tile_m=128 -> 2 row tiles for M=256: both TensorCores busy on v7x.
    out = bert_output(hidden, inp, weight, bias, gamma, beta, tile_m=128)
    out = jax.block_until_ready(out)

    ref = _ref_bert_output(hidden, inp, weight, bias, gamma, beta)
    assert out.shape == (B, S, H)
    err = float(jnp.max(jnp.abs(out - ref)))
    assert jnp.allclose(out, ref, rtol=1e-2, atol=1e-2), f"mismatch: {err}"

    print("KERNEL_OK")
</pallas_src>

<mosaic_0001>
module attributes {stable_mosaic.version = 11 : i64} {
  func.func @bert_output_kernel(%arg0: i32, %arg1: memref<128x512xbf16, #tpu.memory_space<vmem>>, %arg2: memref<512x128xbf16, #tpu.memory_space<vmem>>, %arg3: memref<128x128xf32, #tpu.memory_space<vmem>>, %arg4: memref<3x128xf32, #tpu.memory_space<vmem>>, %arg5: memref<128x128xf32, #tpu.memory_space<vmem>>) attributes {dimension_semantics = [#tpu.dimension_semantics<parallel>], iteration_bounds = array<i64: 2>, scalar_prefetch = 0 : i64, scratch_operands = 0 : i64, tpu.core_type = #tpu.core_type<tc>, window_params = [{transform_indices = @transform_0, window_bounds = array<i64: 128, 512>}, {pipeline_mode = #tpu.pipeline_mode<synchronous>, transform_indices = @transform_1, window_bounds = array<i64: 512, 128>}, {transform_indices = @transform_2, window_bounds = array<i64: 128, 128>}, {pipeline_mode = #tpu.pipeline_mode<synchronous>, transform_indices = @transform_3, window_bounds = array<i64: 3, 128>}, {transform_indices = @transform_4, window_bounds = array<i64: 128, 128>}]} {
    %c0 = arith.constant 0 : index
    %c0_0 = arith.constant 0 : index
    %0 = vector.load %arg1[%c0, %c0_0] : memref<128x512xbf16, #tpu.memory_space<vmem>>, vector<128x512xbf16>
    %c0_1 = arith.constant 0 : index
    %c0_2 = arith.constant 0 : index
    %1 = vector.load %arg2[%c0_1, %c0_2] : memref<512x128xbf16, #tpu.memory_space<vmem>>, vector<512x128xbf16>
    %cst = arith.constant dense<0.000000e+00> : vector<128x128xf32>
    %2 = tpu.matmul %0, %1, %cst {dimension_numbers = #tpu.dot_dimension_numbers<[1], [0], [0], [1], [0, 0, 1, 1], [], []>} : vector<128x512xbf16>, vector<512x128xbf16>, vector<128x128xf32> -> vector<128x128xf32>
    %c0_3 = arith.constant 0 : index
    %c0_4 = arith.constant 0 : index
    %3 = vector.load %arg4[%c0_3, %c0_4] : memref<3x128xf32, #tpu.memory_space<vmem>>, vector<3x128xf32>
    %4 = vector.extract_strided_slice %3 {offsets = [0, 0], sizes = [1, 128], strides = [1, 1]} : vector<3x128xf32> to vector<1x128xf32>
    %5 = vector.extract_strided_slice %3 {offsets = [1, 0], sizes = [1, 128], strides = [1, 1]} : vector<3x128xf32> to vector<1x128xf32>
    %6 = vector.extract_strided_slice %3 {offsets = [2, 0], sizes = [1, 128], strides = [1, 1]} : vector<3x128xf32> to vector<1x128xf32>
    %7 = vector.broadcast %4 : vector<1x128xf32> to vector<128x128xf32>
    %8 = arith.addf %2, %7 : vector<128x128xf32>
    %c0_5 = arith.constant 0 : index
    %c0_6 = arith.constant 0 : index
    %9 = vector.load %arg3[%c0_5, %c0_6] : memref<128x128xf32, #tpu.memory_space<vmem>>, vector<128x128xf32>
    %10 = arith.addf %8, %9 : vector<128x128xf32>
    %cst_7 = arith.constant dense<0.000000e+00> : vector<128xf32>
    %11 = vector.multi_reduction <add>, %10, %cst_7 [1] : vector<128x128xf32> to vector<128xf32>
    %12 = vector.shape_cast %11 : vector<128xf32> to vector<128x1xf32>
    %cst_8 = arith.constant 1.280000e+02 : f32
    %13 = vector.broadcast %cst_8 : f32 to vector<128x1xf32>
    %14 = arith.divf %12, %13 : vector<128x1xf32>
    %15 = arith.mulf %10, %10 : vector<128x128xf32>
    %cst_9 = arith.constant dense<0.000000e+00> : vector<128xf32>
    %16 = vector.multi_reduction <add>, %15, %cst_9 [1] : vector<128x128xf32> to vector<128xf32>
    %17 = vector.shape_cast %16 : vector<128xf32> to vector<128x1xf32>
    %cst_10 = arith.constant 1.280000e+02 : f32
    %18 = vector.broadcast %cst_10 : f32 to vector<128x1xf32>
    %19 = arith.divf %17, %18 : vector<128x1xf32>
    %20 = arith.mulf %14, %14 : vector<128x1xf32>
    %21 = arith.subf %19, %20 : vector<128x1xf32>
    %cst_11 = arith.constant 9.99999996E-13 : f32
    %22 = vector.broadcast %cst_11 : f32 to vector<128x1xf32>
    %23 = arith.addf %21, %22 : vector<128x1xf32>
    %24 = math.rsqrt %23 : vector<128x1xf32>
    %25 = vector.broadcast %14 : vector<128x1xf32> to vector<128x128xf32>
    %26 = arith.subf %10, %25 : vector<128x128xf32>
    %27 = vector.broadcast %24 : vector<128x1xf32> to vector<128x128xf32>
    %28 = arith.mulf %26, %27 : vector<128x128xf32>
    %29 = vector.broadcast %5 : vector<1x128xf32> to vector<128x128xf32>
    %30 = arith.mulf %28, %29 : vector<128x128xf32>
    %31 = vector.broadcast %6 : vector<1x128xf32> to vector<128x128xf32>
    %32 = arith.addf %30, %31 : vector<128x128xf32>
    %c0_12 = arith.constant 0 : index
    %c0_13 = arith.constant 0 : index
    %33 = vector.load %arg5[%c0_12, %c0_13] : memref<128x128xf32, #tpu.memory_space<vmem>>, vector<128x128xf32>
    tpu.vector_store %arg5[%c0_12, %c0_13], %32 {strides = array<i32>} : memref<128x128xf32, #tpu.memory_space<vmem>>, vector<128x128xf32>,
    return
  }
  func.func @transform_0(%arg0: i32) -> (i32, i32) {
    %c0_i32 = arith.constant 0 : i32
    %c0_i32_0 = arith.constant 0 : i32
    return %arg0, %c0_i32 : i32, i32
  }
  func.func @transform_1(%arg0: i32) -> (i32, i32) {
    %c0_i32 = arith.constant 0 : i32
    %c0_i32_0 = arith.constant 0 : i32
    %c0_i32_1 = arith.constant 0 : i32
    return %c0_i32, %c0_i32_0 : i32, i32
  }
  func.func @transform_2(%arg0: i32) -> (i32, i32) {
    %c0_i32 = arith.constant 0 : i32
    %c0_i32_0 = arith.constant 0 : i32
    return %arg0, %c0_i32 : i32, i32
  }
  func.func @transform_3(%arg0: i32) -> (i32, i32) {
    %c0_i32 = arith.constant 0 : i32
    %c0_i32_0 = arith.constant 0 : i32
    %c0_i32_1 = arith.constant 0 : i32
    return %c0_i32, %c0_i32_0 : i32, i32
  }
  func.func @transform_4(%arg0: i32) -> (i32, i32) {
    %c0_i32 = arith.constant 0 : i32
    %c0_i32_0 = arith.constant 0 : i32
    return %arg0, %c0_i32 : i32, i32
  }
}

</mosaic_0001>

<llo_original>
// kernel: tpu_custom_call.1
$region0: #{tpu_custom_call.1}
  #allocation0 [shape = 'u32[]', space=smem, size = 0x4, offset = 0x4, fixed_abs, tag = 'smem constant byte address 0x4 - core index']
  #allocation1 [shape = 'u32[144,128]{1,0:T(1,128)}', space=vmem, size = 0x12000, scoped, tag = 'internal scratch']
  %s0 = inlined_call_operand.hbm [shape: bf16[256,512], index: 0, kind: input, shape index: {}]
  %s1 = inlined_call_operand.hbm [shape: bf16[512,128], index: 1, kind: input, shape index: {}]
  %s2 = inlined_call_operand.hbm [shape: f32[256,128], index: 2, kind: input, shape index: {}]
  %s3 = inlined_call_operand.vmem [shape: f32[3,128], index: 3, kind: input, shape index: {}]
  %s4 = inlined_call_operand.hbm [shape: f32[256,128], index: 4, kind: output, shape index: {}]
  %s5 = sld [smem:[#allocation0]]
  $region61: #{tpu_custom_call.1} parent=0
    _
  %s7 = ssub.s32 1, %s5
  %s8 = scalar_select 0, %s7, %s5
  $region1: #{tpu_custom_call.1} parent=0
    #allocation2 [shape = 'u8[262144]{0}', space=vmem, size = 0x40000, scoped, tag = 'input window, operand 0']
    #allocation3 [shape = 's32[2]{0}', space=sflag, size = 0x8, scoped, tag = 'scoped memory for tpu_custom_call.1']
    #allocation4 [shape = 's32[2]{0}', space=sflag, size = 0x8, scoped, tag = 'scoped memory for tpu_custom_call.1']
    #allocation5 [shape = 'u8[131072]{0}', space=vmem, size = 0x20000, scoped, tag = 'input window, operand 1, single buffered']
    #allocation6 [shape = 's32[1]{0}', space=sflag, size = 0x4, scoped, tag = 'scoped memory for tpu_custom_call.1']
    #allocation7 [shape = 'u8[131072]{0}', space=vmem, size = 0x20000, scoped, tag = 'input window, operand 2']
    #allocation8 [shape = 'u8[131072]{0}', space=vmem, size = 0x20000, scoped, tag = 'output window, operand 0']
    %9 = vsyncpa [#allocation3], 0
    %s10 = scalar_lea.sflag [#allocation3], 1
    %11 = vsyncpa %s10, 0
    %12 = vsyncpa [#allocation6], 0
    %13 = vsyncpa [#allocation4], 0
    %s14 = scalar_lea.sflag [#allocation4], 1
    %15 = vsyncpa %s14, 0
    loop: start=0, step=1, limit=4
    $region2: #{tpu_custom_call.1} parent=1 // loop_pre_header
      _
    $region3: #{tpu_custom_call.1} parent=1 // loop_header
      %s17 = sphi 0, %s21
      %p18 = scmp.ge.s32.totalorder %s17, 4
      %s27 = sphi 0, %s29
      %s30 = sphi 0, %s27
      %s31 = sphi 0, %s30
      %s47 = sphi 0, %s31
      %s51 = sphi 0, %s51
      %s53 = sphi 0, %s51
      %s54 = sphi 0, %s53
      %s68 = sphi 0, %s54
      %s74 = sphi 0, %s76
      %s77 = sphi 0, %s74
      %s78 = sphi 0, %s77
      %s94 = sphi 0, %s78
      %s98 = sphi 0, %s98
      %s100 = sphi 0, %s98
      %s101 = sphi 0, %s100
      %s115 = sphi 0, %s101
      %s121 = sphi 0, %s123
      %s124 = sphi 0, %s121
      %s125 = sphi 0, %s124
      %s141 = sphi 0, %s125
    $region4: #{tpu_custom_call.1} parent=1 // loop_header_branch
      %20 = sbr.rel (%p18) target = $region8
    $region5: #{tpu_custom_call.1} parent=1 // loop_body
      %s22 = ssub.s32 %s17, 1
      %s23 = ssub.s32 %s17, 2
      %s24 = sadd.s32 %s17, 1
      %s25 = ssub.s32 %s17, %s24
      %p26 = scmp.eq.s32.totalorder %s25, 0
      %s28 = sadd.s32 %s27, 1
      %s29 = scalar_select %p26, %s27, %s28
      %p32 = pneg %p26
      %p33 = scmp.eq.s32.totalorder %s17, 1
      %p34 = por %p32, %p33
      %p35 = scmp.ne.s32.totalorder %s27, %s30
      %p36 = scmp.eq.s32.totalorder %s17, 0
      %p37 = por %p35, %p36
      %p38 = scmp.ne.s32.totalorder %s27, %s30
      %p39 = scmp.eq.s32.totalorder %s22, 1
      %p40 = por %p38, %p39
      %p41 = scmp.ne.s32.totalorder %s30, %s31
      %p42 = scmp.eq.s32.totalorder %s22, 0
      %p43 = por %p41, %p42
      %p44 = scmp.ne.s32.totalorder %s30, %s31
      %p45 = scmp.eq.s32.totalorder %s23, 1
      %p46 = por %p44, %p45
      %p48 = scmp.ne.s32.totalorder %s31, %s47
      %p49 = scmp.eq.s32.totalorder %s23, 0
      %p50 = por %p48, %p49
      %s52 = sadd.s32 %s51, 1
      %p55 = scmp.eq.s32.totalorder %s17, 1
      %p56 = scmp.ne.s32.totalorder %s51, %s53
      %p57 = scmp.eq.s32.totalorder %s17, 0
      %p58 = por %p56, %p57
      %p59 = scmp.ne.s32.totalorder %s51, %s53
      %p60 = scmp.eq.s32.totalorder %s22, 1
      %p61 = por %p59, %p60
      %p62 = scmp.ne.s32.totalorder %s53, %s54
      %p63 = scmp.eq.s32.totalorder %s22, 0
      %p64 = por %p62, %p63
      %p65 = scmp.ne.s32.totalorder %s53, %s54
      %p66 = scmp.eq.s32.totalorder %s23, 1
      %p67 = por %p65, %p66
      %p69 = scmp.ne.s32.totalorder %s54, %s68
      %p70 = scmp.eq.s32.totalorder %s23, 0
      %p71 = por %p69, %p70
      %s72 = ssub.s32 %s17, %s24
      %p73 = scmp.eq.s32.totalorder %s72, 0
      %s75 = sadd.s32 %s74, 1
      %s76 = scalar_select %p73, %s74, %s75
      %p79 = pneg %p73
      %p80 = scmp.eq.s32.totalorder %s17, 1
      %p81 = por %p79, %p80
      %p82 = scmp.ne.s32.totalorder %s74, %s77
      %p83 = scmp.eq.s32.totalorder %s17, 0
      %p84 = por %p82, %p83
      %p85 = scmp.ne.s32.totalorder %s74, %s77
      %p86 = scmp.eq.s32.totalorder %s22, 1
      %p87 = por %p85, %p86
      %p88 = scmp.ne.s32.totalorder %s77, %s78
      %p89 = scmp.eq.s32.totalorder %s22, 0
      %p90 = por %p88, %p89
      %p91 = scmp.ne.s32.totalorder %s77, %s78
      %p92 = scmp.eq.s32.totalorder %s23, 1
      %p93 = por %p91, %p92
      %p95 = scmp.ne.s32.totalorder %s78, %s94
      %p96 = scmp.eq.s32.totalorder %s23, 0
      %p97 = por %p95, %p96
      %s99 = sadd.s32 %s98, 1
      %p102 = scmp.eq.s32.totalorder %s17, 1
      %p103 = scmp.ne.s32.totalorder %s98, %s100
      %p104 = scmp.eq.s32.totalorder %s17, 0
      %p105 = por %p103, %p104
      %p106 = scmp.ne.s32.totalorder %s98, %s100
      %p107 = scmp.eq.s32.totalorder %s22, 1
      %p108 = por %p106, %p107
      %p109 = scmp.ne.s32.totalorder %s100, %s101
      %p110 = scmp.eq.s32.totalorder %s22, 0
      %p111 = por %p109, %p110
      %p112 = scmp.ne.s32.totalorder %s100, %s101
      %p113 = scmp.eq.s32.totalorder %s23, 1
      %p114 = por %p112, %p113
      %p116 = scmp.ne.s32.totalorder %s101, %s115
      %p117 = scmp.eq.s32.totalorder %s23, 0
      %p118 = por %p116, %p117
      %s119 = ssub.s32 %s17, %s24
      %p120 = scmp.eq.s32.totalorder %s119, 0
      %s122 = sadd.s32 %s121, 1
      %s123 = scalar_select %p120, %s121, %s122
      %p126 = pneg %p120
      %p127 = scmp.eq.s32.totalorder %s17, 1
      %p128 = por %p126, %p127
      %p129 = scmp.ne.s32.totalorder %s121, %s124
      %p130 = scmp.eq.s32.totalorder %s17, 0
      %p131 = por %p129, %p130
      %p132 = scmp.ne.s32.totalorder %s121, %s124
      %p133 = scmp.eq.s32.totalorder %s22, 1
      %p134 = por %p132, %p133
      %p135 = scmp.ne.s32.totalorder %s124, %s125
      %p136 = scmp.eq.s32.totalorder %s22, 0
      %p137 = por %p135, %p136
      %p138 = scmp.ne.s32.totalorder %s124, %s125
      %p139 = scmp.eq.s32.totalorder %s23, 1
      %p140 = por %p138, %p139
      %p142 = scmp.ne.s32.totalorder %s125, %s141
      %p143 = scmp.eq.s32.totalorder %s23, 0
      %p144 = por %p142, %p143
      %p145 = scmp.le.s32.totalorder 1, %s17
      %p146 = scmp.lt.s32.totalorder %s17, 3
      %p147 = pnand %p145, %p146
      %p148 = pneg %p147
      // Predicated region
      $region9: #{tpu_custom_call.1} parent=5 // pred_check
        _
      $region10: #{tpu_custom_call.1} parent=5 // pred_check_branch
        %150 = sbr.rel (%p147) target = $region12
      $region11: #{tpu_custom_call.1} parent=5 // pred_region
        %s151 = ssub.s32 %s17, 1
        // Predicated region
        $region13: #{tpu_custom_call.1} parent=11 // pred_check
          %p152 = pneg %p64
        $region14: #{tpu_custom_call.1} parent=11 // pred_check_branch
          %154 = sbr.rel (%p152) target = $region16
        $region15: #{tpu_custom_call.1} parent=11 // pred_region
          %s156 = ssub.s32 4096, 4096
          %157 = vsyncadd [#allocation6], %s156
          %s158 = sshll.u32 [#allocation5], 4
          %s159 = int_to_ptr.vmem [resolvable:$true] %s158
          %164 = dma.hbm_to_vmem [thread:$0]  %s1, 4096, %s159, [#allocation6], 64, 64, 4
        $region16: #{tpu_custom_call.1} parent=11 // pred_fallthru
          _
        // Predicated region
        $region17: #{tpu_custom_call.1} parent=11 // pred_check
          %p165 = pneg %p111
        $region18: #{tpu_custom_call.1} parent=11 // pred_check_branch
          %167 = sbr.rel (%p165) target = $region20
        $region19: #{tpu_custom_call.1} parent=11 // pred_region
          _
        $region20: #{tpu_custom_call.1} parent=11 // pred_fallthru
          _
      $region12: #{tpu_custom_call.1} parent=5 // pred_fallthru
        _
      %p168 = scmp.lt.s32.totalorder %s17, 2
      // Predicated region
      $region21: #{tpu_custom_call.1} parent=5 // pred_check
        %p169 = pneg %p168
      $region22: #{tpu_custom_call.1} parent=5 // pred_check_branch
        %171 = sbr.rel (%p169) target = $region24
      $region23: #{tpu_custom_call.1} parent=5 // pred_region
        // Predicated region
        $region25: #{tpu_custom_call.1} parent=23 // pred_check
          %p172 = pneg %p37
        $region26: #{tpu_custom_call.1} parent=23 // pred_check_branch
          %174 = sbr.rel (%p172) target = $region28
        $region27: #{tpu_custom_call.1} parent=23 // pred_region
          %s175 = sand.u32 %s17, 1
          %s176 = scalar_lea.sflag [#allocation3], %s175
          %s177 = sand.u32 %s27, 1
          %s178 = smul.addr %s177, 256
          %s179 = scalar_lea.vmem [#allocation2], %s178
          %s180 = smul.u32 16, %s17
          %s182 = ssub.s32 4096, 4096
          %183 = vsyncadd %s176, %s182
          %s184 = smul.addr %s180, 4
          %s185 = smul.addr %s184, 64
          %s186 = scalar_lea.hbm %s0, %s185
          %s187 = sshll.u32 %s179, 4
          %s188 = int_to_ptr.vmem [resolvable:$true] %s187
          %193 = dma.hbm_to_vmem [thread:$0]  %s186, 4096, %s188, %s176, 256, 256, 16
        $region28: #{tpu_custom_call.1} parent=23 // pred_fallthru
          _
        // Predicated region
        $region29: #{tpu_custom_call.1} parent=23 // pred_check
          %p194 = pneg %p84
        $region30: #{tpu_custom_call.1} parent=23 // pred_check_branch
          %196 = sbr.rel (%p194) target = $region32
        $region31: #{tpu_custom_call.1} parent=23 // pred_region
          %s197 = sand.u32 %s17, 1
          %s198 = scalar_lea.sflag [#allocation3], %s197
          %s199 = sand.u32 %s74, 1
          %s200 = smul.addr %s199, 128
          %s201 = scalar_lea.vmem [#allocation7], %s200
          %s202 = smul.u32 16, %s17
          %s204 = ssub.s32 2048, 2048
          %205 = vsyncadd %s198, %s204
          %s206 = smul.addr %s202, 128
          %s207 = scalar_lea.hbm %s2, %s206
          %s208 = sshll.u32 %s201, 4
          %s209 = int_to_ptr.vmem [resolvable:$true] %s208
          %214 = dma.hbm_to_vmem [thread:$0]  %s207, 2048, %s209, %s198, 128, 128, 8
        $region32: #{tpu_custom_call.1} parent=23 // pred_fallthru
          _
      $region24: #{tpu_custom_call.1} parent=5 // pred_fallthru
        _
      %p215 = scmp.le.s32.totalorder 1, %s17
      %p216 = scmp.lt.s32.totalorder %s17, 3
      %p217 = pnand %p215, %p216
      %p218 = pneg %p217
      // Predicated region
      $region33: #{tpu_custom_call.1} parent=5 // pred_check
        _
      $region34: #{tpu_custom_call.1} parent=5 // pred_check_branch
        %220 = sbr.rel (%p217) target = $region36
      $region35: #{tpu_custom_call.1} parent=5 // pred_region
        %s221 = ssub.s32 %s17, 1
        %s222 = sand.u32 %s22, 1
        %s223 = scalar_lea.sflag [#allocation3], %s222
        %s224 = sand.u32 %s30, 1
        %s225 = smul.addr %s224, 256
        %s226 = scalar_lea.vmem [#allocation2], %s225
        // Predicated region
        $region37: #{tpu_custom_call.1} parent=35 // pred_check
          %p227 = pneg %p43
        $region38: #{tpu_custom_call.1} parent=35 // pred_check_branch
          %229 = sbr.rel (%p227) target = $region40
        $region39: #{tpu_custom_call.1} parent=35 // pred_region
          %230 = dma.done %s223, 4096
        $region40: #{tpu_custom_call.1} parent=35 // pred_fallthru
          _
        // Predicated region
        $region41: #{tpu_custom_call.1} parent=35 // pred_check
          %p231 = pneg %p64
        $region42: #{tpu_custom_call.1} parent=35 // pred_check_branch
          %233 = sbr.rel (%p231) target = $region44
        $region43: #{tpu_custom_call.1} parent=35 // pred_region
          %234 = dma.done [#allocation6], 4096
        $region44: #{tpu_custom_call.1} parent=35 // pred_fallthru
          _
        %s235 = sand.u32 %s22, 1
        %s236 = scalar_lea.sflag [#allocation3], %s235
        %s237 = sand.u32 %s77, 1
        %s238 = smul.addr %s237, 128
        %s239 = scalar_lea.vmem [#allocation7], %s238
        // Predicated region
        $region45: #{tpu_custom_call.1} parent=35 // pred_check
          %p240 = pneg %p90
        $region46: #{tpu_custom_call.1} parent=35 // pred_check_branch
          %242 = sbr.rel (%p240) target = $region48
        $region47: #{tpu_custom_call.1} parent=35 // pred_region
          %243 = dma.done %s236, 2048
        $region48: #{tpu_custom_call.1} parent=35 // pred_fallthru
          _
        %s244 = sand.u32 %s22, 1
        %s245 = scalar_lea.sflag [#allocation3], %s244
        %s246 = sand.u32 %s30, 1
        %s247 = smul.addr %s246, 256
        %s248 = scalar_lea.vmem [#allocation2], %s247
        %p249 = pneg %p43
        %p250 = pneg %p40
        %p251 = pneg %p64
        %p252 = pneg %p61
        %s253 = sand.u32 %s22, 1
        %s254 = scalar_lea.sflag [#allocation3], %s253
        %s255 = sand.u32 %s77, 1
        %s256 = smul.addr %s255, 128
        %s257 = scalar_lea.vmem [#allocation7], %s256
        %p258 = pneg %p90
        %p259 = pneg %p87
        %p260 = pneg %p111
        %p261 = pneg %p108
        %p262 = pneg %p137
        %p263 = pneg %p134
        %s264 = sand.u32 %s124, 1
        %s265 = scalar_lea.sflag [#allocation4], %s264
        %s266 = sand.u32 %s124, 1
        %s267 = smul.addr %s266, 128
        %s268 = scalar_lea.vmem [#allocation8], %s267
        %s269 = smul.u32 16, %s22
        %s270 = smul.u32 16, %s22
        %s271 = smul.u32 16, %s22
        %v273 = vld [vmem:[%s226] sm:$0xff]
        %v274 = vld [vmem:[%s226 + $0x8] sm:$0xff]
        %v275 = vld [vmem:[%s226 + $0x10] sm:$0xff]
        %v276 = vld [vmem:[%s226 + $0x18] sm:$0xff]
        %v277 = vld [vmem:[%s226 + $0x20] sm:$0xff]
        %v278 = vld [vmem:[%s226 + $0x28] sm:$0xff]
        %v279 = vld [vmem:[%s226 + $0x30] sm:$0xff]
        %v280 = vld [vmem:[%s226 + $0x38] sm:$0xff]
        %v281 = vld [vmem:[%s226 + $0x40] sm:$0xff]
        %v282 = vld [vmem:[%s226 + $0x48] sm:$0xff]
        %v283 = vld [vmem:[%s226 + $0x50] sm:$0xff]
        %v284 = vld [vmem:[%s226 + $0x58] sm:$0xff]
        %v285 = vld [vmem:[%s226 + $0x60] sm:$0xff]
        %v286 = vld [vmem:[%s226 + $0x68] sm:$0xff]
        %v287 = vld [vmem:[%s226 + $0x70] sm:$0xff]
        %v288 = vld [vmem:[%s226 + $0x78] sm:$0xff]
        %v289 = vld [vmem:[%s226 + $0x80] sm:$0xff]
        %v290 = vld [vmem:[%s226 + $0x88] sm:$0xff]
        %v291 = vld [vmem:[%s226 + $0x90] sm:$0xff]
        %v292 = vld [vmem:[%s226 + $0x98] sm:$0xff]
        %v293 = vld [vmem:[%s226 + $0xa0] sm:$0xff]
        %v294 = vld [vmem:[%s226 + $0xa8] sm:$0xff]
        %v295 = vld [vmem:[%s226 + $0xb0] sm:$0xff]
        %v296 = vld [vmem:[%s226 + $0xb8] sm:$0xff]
        %v297 = vld [vmem:[%s226 + $0xc0] sm:$0xff]
        %v298 = vld [vmem:[%s226 + $0xc8] sm:$0xff]
        %v299 = vld [vmem:[%s226 + $0xd0] sm:$0xff]
        %v300 = vld [vmem:[%s226 + $0xd8] sm:$0xff]
        %v301 = vld [vmem:[%s226 + $0xe0] sm:$0xff]
        %v302 = vld [vmem:[%s226 + $0xe8] sm:$0xff]
        %v303 = vld [vmem:[%s226 + $0xf0] sm:$0xff]
        %v304 = vld [vmem:[%s226 + $0xf8] sm:$0xff]
        %v305 = vld [vmem:[#allocation5] sm:$0xf]
        %v306 = vld [vmem:[#allocation5 + $0x4] sm:$0xf]
        %v307 = vld [vmem:[#allocation5 + $0x8] sm:$0xf]
        %v308 = vld [vmem:[#allocation5 + $0xc] sm:$0xf]
        %v309 = vld [vmem:[#allocation5 + $0x10] sm:$0xf]
        %v310 = vld [vmem:[#allocation5 + $0x14] sm:$0xf]
        %v311 = vld [vmem:[#allocation5 + $0x18] sm:$0xf]
        %v312 = vld [vmem:[#allocation5 + $0x1c] sm:$0xf]
        %v313 = vld [vmem:[#allocation5 + $0x20] sm:$0xf]
        %v314 = vld [vmem:[#allocation5 + $0x24] sm:$0xf]
        %v315 = vld [vmem:[#allocation5 + $0x28] sm:$0xf]
        %v316 = vld [vmem:[#allocation5 + $0x2c] sm:$0xf]
        %v317 = vld [vmem:[#allocation5 + $0x30] sm:$0xf]
        %v318 = vld [vmem:[#allocation5 + $0x34] sm:$0xf]
        %v319 = vld [vmem:[#allocation5 + $0x38] sm:$0xf]
        %v320 = vld [vmem:[#allocation5 + $0x3c] sm:$0xf]
        %v321 = vld [vmem:[#allocation5 + $0x40] sm:$0xf]
        %v322 = vld [vmem:[#allocation5 + $0x44] sm:$0xf]
        %v323 = vld [vmem:[#allocation5 + $0x48] sm:$0xf]
        %v324 = vld [vmem:[#allocation5 + $0x4c] sm:$0xf]
        %v325 = vld [vmem:[#allocation5 + $0x50] sm:$0xf]
        %v326 = vld [vmem:[#allocation5 + $0x54] sm:$0xf]
        %v327 = vld [vmem:[#allocation5 + $0x58] sm:$0xf]
        %v328 = vld [vmem:[#allocation5 + $0x5c] sm:$0xf]
        %v329 = vld [vmem:[#allocation5 + $0x60] sm:$0xf]
        %v330 = vld [vmem:[#allocation5 + $0x64] sm:$0xf]
        %v331 = vld [vmem:[#allocation5 + $0x68] sm:$0xf]
        %v332 = vld [vmem:[#allocation5 + $0x6c] sm:$0xf]
        %v333 = vld [vmem:[#allocation5 + $0x70] sm:$0xf]
        %v334 = vld [vmem:[#allocation5 + $0x74] sm:$0xf]
        %v335 = vld [vmem:[#allocation5 + $0x78] sm:$0xf]
        %v336 = vld [vmem:[#allocation5 + $0x7c] sm:$0xf]
        %v337 = vld [vmem:[#allocation5 + $0x80] sm:$0xf]
        %v338 = vld [vmem:[#allocation5 + $0x84] sm:$0xf]
        %v339 = vld [vmem:[#allocation5 + $0x88] sm:$0xf]
        %v340 = vld [vmem:[#allocation5 + $0x8c] sm:$0xf]
        %v341 = vld [vmem:[#allocation5 + $0x90] sm:$0xf]
        %v342 = vld [vmem:[#allocation5 + $0x94] sm:$0xf]
        %v343 = vld [vmem:[#allocation5 + $0x98] sm:$0xf]
        %v344 = vld [vmem:[#allocation5 + $0x9c] sm:$0xf]
        %v345 = vld [vmem:[#allocation5 + $0xa0] sm:$0xf]
        %v346 = vld [vmem:[#allocation5 + $0xa4] sm:$0xf]
        %v347 = vld [vmem:[#allocation5 + $0xa8] sm:$0xf]
        %v348 = vld [vmem:[#allocation5 + $0xac] sm:$0xf]
        %v349 = vld [vmem:[#allocation5 + $0xb0] sm:$0xf]
        %v350 = vld [vmem:[#allocation5 + $0xb4] sm:$0xf]
        %v351 = vld [vmem:[#allocation5 + $0xb8] sm:$0xf]
        %v352 = vld [vmem:[#allocation5 + $0xbc] sm:$0xf]
        %v353 = vld [vmem:[#allocation5 + $0xc0] sm:$0xf]
        %v354 = vld [vmem:[#allocation5 + $0xc4] sm:$0xf]
        %v355 = vld [vmem:[#allocation5 + $0xc8] sm:$0xf]
        %v356 = vld [vmem:[#allocation5 + $0xcc] sm:$0xf]
        %v357 = vld [vmem:[#allocation5 + $0xd0] sm:$0xf]
        %v358 = vld [vmem:[#allocation5 + $0xd4] sm:$0xf]
        %v359 = vld [vmem:[#allocation5 + $0xd8] sm:$0xf]
        %v360 = vld [vmem:[#allocation5 + $0xdc] sm:$0xf]
        %v361 = vld [vmem:[#allocation5 + $0xe0] sm:$0xf]
        %v362 = vld [vmem:[#allocation5 + $0xe4] sm:$0xf]
        %v363 = vld [vmem:[#allocation5 + $0xe8] sm:$0xf]
        %v364 = vld [vmem:[#allocation5 + $0xec] sm:$0xf]
        %v365 = vld [vmem:[#allocation5 + $0xf0] sm:$0xf]
        %v366 = vld [vmem:[#allocation5 + $0xf4] sm:$0xf]
        %v367 = vld [vmem:[#allocation5 + $0xf8] sm:$0xf]
        %v368 = vld [vmem:[#allocation5 + $0xfc] sm:$0xf]
        %v369 = vld [vmem:[%s3] sm:$0x7]
        %v370 = vlaneseq
        %v371 = vshrl.u32 %v370, 7
        %v372 = vsub.s32 0, %v371
        %v373 = vrot.slane %v369, %v372
        %v406 = vunpack.c.l.b16 %v273
        %v407 = vunpack.c.h.b16 %v273
        %v408 = vunpack.c.l.b16 %v274
        %v409 = vunpack.c.h.b16 %v274
        %v410 = vunpack.c.l.b16 %v275
        %v411 = vunpack.c.h.b16 %v275
        %v412 = vunpack.c.l.b16 %v276
        %v413 = vunpack.c.h.b16 %v276
        %v414 = vunpack.c.l.b16 %v277
        %v415 = vunpack.c.h.b16 %v277
        %v416 = vunpack.c.l.b16 %v278
        %v417 = vunpack.c.h.b16 %v278
        %v418 = vunpack.c.l.b16 %v279
        %v419 = vunpack.c.h.b16 %v279
        %v420 = vunpack.c.l.b16 %v280
        %v421 = vunpack.c.h.b16 %v280
        %v422 = vunpack.c.l.b16 %v281
        %v423 = vunpack.c.h.b16 %v281
        %v424 = vunpack.c.l.b16 %v282
        %v425 = vunpack.c.h.b16 %v282
        %v426 = vunpack.c.l.b16 %v283
        %v427 = vunpack.c.h.b16 %v283
        %v428 = vunpack.c.l.b16 %v284
        %v429 = vunpack.c.h.b16 %v284
        %v430 = vunpack.c.l.b16 %v285
        %v431 = vunpack.c.h.b16 %v285
        %v432 = vunpack.c.l.b16 %v286
        %v433 = vunpack.c.h.b16 %v286
        %v434 = vunpack.c.l.b16 %v287
        %v435 = vunpack.c.h.b16 %v287
        %v436 = vunpack.c.l.b16 %v288
        %v437 = vunpack.c.h.b16 %v288
        %v438 = vunpack.c.l.b16 %v289
        %v439 = vunpack.c.h.b16 %v289
        %v440 = vunpack.c.l.b16 %v290
        %v441 = vunpack.c.h.b16 %v290
        %v442 = vunpack.c.l.b16 %v291
        %v443 = vunpack.c.h.b16 %v291
        %v444 = vunpack.c.l.b16 %v292
        %v445 = vunpack.c.h.b16 %v292
        %v446 = vunpack.c.l.b16 %v293
        %v447 = vunpack.c.h.b16 %v293
        %v448 = vunpack.c.l.b16 %v294
        %v449 = vunpack.c.h.b16 %v294
        %v450 = vunpack.c.l.b16 %v295
        %v451 = vunpack.c.h.b16 %v295
        %v452 = vunpack.c.l.b16 %v296
        %v453 = vunpack.c.h.b16 %v296
        %v454 = vunpack.c.l.b16 %v297
        %v455 = vunpack.c.h.b16 %v297
        %v456 = vunpack.c.l.b16 %v298
        %v457 = vunpack.c.h.b16 %v298
        %v458 = vunpack.c.l.b16 %v299
        %v459 = vunpack.c.h.b16 %v299
        %v460 = vunpack.c.l.b16 %v300
        %v461 = vunpack.c.h.b16 %v300
        %v462 = vunpack.c.l.b16 %v301
        %v463 = vunpack.c.h.b16 %v301
        %v464 = vunpack.c.l.b16 %v302
        %v465 = vunpack.c.h.b16 %v302
        %v466 = vunpack.c.l.b16 %v303
        %v467 = vunpack.c.h.b16 %v303
        %v468 = vunpack.c.l.b16 %v304
        %v469 = vunpack.c.h.b16 %v304
        %v470 = vpack.c.b16 %v410, %v406
        %v471 = vpack.c.b16 %v411, %v407
        %v472 = vpack.c.b16 %v412, %v408
        %v473 = vpack.c.b16 %v413, %v409
        %v474 = vpack.c.b16 %v418, %v414
        %v475 = vpack.c.b16 %v419, %v415
        %v476 = vpack.c.b16 %v420, %v416
        %v477 = vpack.c.b16 %v421, %v417
        %v478 = vpack.c.b16 %v426, %v422
        %v479 = vpack.c.b16 %v427, %v423
        %v480 = vpack.c.b16 %v428, %v424
        %v481 = vpack.c.b16 %v429, %v425
        %v482 = vpack.c.b16 %v434, %v430
        %v483 = vpack.c.b16 %v435, %v431
        %v484 = vpack.c.b16 %v436, %v432
        %v485 = vpack.c.b16 %v437, %v433
        %v486 = vpack.c.b16 %v442, %v438
        %v487 = vpack.c.b16 %v443, %v439
        %v488 = vpack.c.b16 %v444, %v440
        %v489 = vpack.c.b16 %v445, %v441
        %v490 = vpack.c.b16 %v450, %v446
        %v491 = vpack.c.b16 %v451, %v447
        %v492 = vpack.c.b16 %v452, %v448
        %v493 = vpack.c.b16 %v453, %v449
        %v494 = vpack.c.b16 %v458, %v454
        %v495 = vpack.c.b16 %v459, %v455
        %v496 = vpack.c.b16 %v460, %v456
        %v497 = vpack.c.b16 %v461, %v457
        %v498 = vpack.c.b16 %v466, %v462
        %v499 = vpack.c.b16 %v467, %v463
        %v500 = vpack.c.b16 %v468, %v464
        %v501 = vpack.c.b16 %v469, %v465
        %v598 = vunpack.c.l.b16 %v305
        %v599 = vunpack.c.l.b16 %v306
        %v600 = vunpack.c.l.b16 %v307
        %v601 = vunpack.c.l.b16 %v308
        %v602 = vunpack.c.l.b16 %v309
        %v603 = vunpack.c.l.b16 %v310
        %v604 = vunpack.c.l.b16 %v311
        %v605 = vunpack.c.l.b16 %v312
        %v606 = vunpack.c.l.b16 %v313
        %v607 = vunpack.c.l.b16 %v314
        %v608 = vunpack.c.l.b16 %v315
        %v609 = vunpack.c.l.b16 %v316
        %v610 = vunpack.c.l.b16 %v317
        %v611 = vunpack.c.l.b16 %v318
        %v612 = vunpack.c.l.b16 %v319
        %v613 = vunpack.c.l.b16 %v320
        %v614 = vunpack.c.l.b16 %v321
        %v615 = vunpack.c.l.b16 %v322
        %v616 = vunpack.c.l.b16 %v323
        %v617 = vunpack.c.l.b16 %v324
        %v618 = vunpack.c.l.b16 %v325
        %v619 = vunpack.c.l.b16 %v326
        %v620 = vunpack.c.l.b16 %v327
        %v621 = vunpack.c.l.b16 %v328
        %v622 = vunpack.c.l.b16 %v329
        %v623 = vunpack.c.l.b16 %v330
        %v624 = vunpack.c.l.b16 %v331
        %v625 = vunpack.c.l.b16 %v332
        %v626 = vunpack.c.l.b16 %v333
        %v627 = vunpack.c.l.b16 %v334
        %v628 = vunpack.c.l.b16 %v335
        %v629 = vunpack.c.l.b16 %v336
        %v630 = vunpack.c.l.b16 %v337
        %v631 = vunpack.c.l.b16 %v338
        %v632 = vunpack.c.l.b16 %v339
        %v633 = vunpack.c.l.b16 %v340
        %v634 = vunpack.c.l.b16 %v341
        %v635 = vunpack.c.l.b16 %v342
        %v636 = vunpack.c.l.b16 %v343
        %v637 = vunpack.c.l.b16 %v344
        %v638 = vunpack.c.l.b16 %v345
        %v639 = vunpack.c.l.b16 %v346
        %v640 = vunpack.c.l.b16 %v347
        %v641 = vunpack.c.l.b16 %v348
        %v642 = vunpack.c.l.b16 %v349
        %v643 = vunpack.c.l.b16 %v350
        %v644 = vunpack.c.l.b16 %v351
        %v645 = vunpack.c.l.b16 %v352
        %v646 = vunpack.c.l.b16 %v353
        %v647 = vunpack.c.l.b16 %v354
        %v648 = vunpack.c.l.b16 %v355
        %v649 = vunpack.c.l.b16 %v356
        %v650 = vunpack.c.l.b16 %v357
        %v651 = vunpack.c.l.b16 %v358
        %v652 = vunpack.c.l.b16 %v359
        %v653 = vunpack.c.l.b16 %v360
        %v654 = vunpack.c.l.b16 %v361
        %v655 = vunpack.c.l.b16 %v362
        %v656 = vunpack.c.l.b16 %v363
        %v657 = vunpack.c.l.b16 %v364
        %v658 = vunpack.c.l.b16 %v365
        %v659 = vunpack.c.l.b16 %v366
        %v660 = vunpack.c.l.b16 %v367
        %v661 = vunpack.c.l.b16 %v368
        %v662 = vpack.c.b16 %v599, %v598
        %v663 = vpack.c.b16 %v601, %v600
        %v664 = vpack.c.b16 %v603, %v602
        %v665 = vpack.c.b16 %v605, %v604
        %v666 = vpack.c.b16 %v607, %v606
        %v667 = vpack.c.b16 %v609, %v608
        %v668 = vpack.c.b16 %v611, %v610
        %v669 = vpack.c.b16 %v613, %v612
        %v670 = vpack.c.b16 %v615, %v614
        %v671 = vpack.c.b16 %v617, %v616
        %v672 = vpack.c.b16 %v619, %v618
        %v673 = vpack.c.b16 %v621, %v620
        %v674 = vpack.c.b16 %v623, %v622
        %v675 = vpack.c.b16 %v625, %v624
        %v676 = vpack.c.b16 %v627, %v626
        %v677 = vpack.c.b16 %v629, %v628
        %v678 = vpack.c.b16 %v631, %v630
        %v679 = vpack.c.b16 %v633, %v632
        %v680 = vpack.c.b16 %v635, %v634
        %v681 = vpack.c.b16 %v637, %v636
        %v682 = vpack.c.b16 %v639, %v638
        %v683 = vpack.c.b16 %v641, %v640
        %v684 = vpack.c.b16 %v643, %v642
        %v685 = vpack.c.b16 %v645, %v644
        %v686 = vpack.c.b16 %v647, %v646
        %v687 = vpack.c.b16 %v649, %v648
        %v688 = vpack.c.b16 %v651, %v650
        %v689 = vpack.c.b16 %v653, %v652
        %v690 = vpack.c.b16 %v655, %v654
        %v691 = vpack.c.b16 %v657, %v656
        %v692 = vpack.c.b16 %v659, %v658
        %v693 = vpack.c.b16 %v661, %v660
        %726 = vmatprep.subr.bf16.mxu0 0
        %727 = vmatpush1.bf16.msra.mxu0 %v669
        %728 = vmatprep.subr.bf16.mxu0 0
        %729 = vmatpush1.bf16.msra.mxu0 %v668
        %730 = vmatprep.subr.bf16.mxu0 0
        %731 = vmatpush1.bf16.msra.mxu0 %v667
        %732 = vmatprep.subr.bf16.mxu0 0
        %733 = vmatpush1.bf16.msra.mxu0 %v666
        %734 = vmatprep.subr.bf16.mxu0 0
        %735 = vmatpush1.bf16.msra.mxu0 %v665
        %736 = vmatprep.subr.bf16.mxu0 0
        %737 = vmatpush1.bf16.msra.mxu0 %v664
        %738 = vmatprep.subr.bf16.mxu0 0
        %739 = vmatpush1.bf16.msra.mxu0 %v663
        %740 = vmatprep.subr.bf16.mxu0 0
        %741 = vmatpush1.bf16.msra.mxu0 %v662
        %742 = vmatprep.subr.bf16.mxu0 0
        %743 = vmatpush2.bf16.msra.mxu0 %v677
        %744 = vmatprep.subr.bf16.mxu0 0
        %745 = vmatpush2.bf16.msra.mxu0 %v676
        %746 = vmatprep.subr.bf16.mxu0 0
        %747 = vmatpush2.bf16.msra.mxu0 %v675
        %748 = vmatprep.subr.bf16.mxu0 0
        %749 = vmatpush2.bf16.msra.mxu0 %v674
        %750 = vmatprep.subr.bf16.mxu0 0
        %751 = vmatpush2.bf16.msra.mxu0 %v673
        %752 = vmatprep.subr.bf16.mxu0 0
        %753 = vmatpush2.bf16.msra.mxu0 %v672
        %754 = vmatprep.subr.bf16.mxu0 0
        %755 = vmatpush2.bf16.msra.mxu0 %v671
        %756 = vmatprep.subr.bf16.mxu0 0
        %757 = vmatpush2.bf16.msra.mxu0 %v670
        %758 = vmatprep.mubr.bf16.mxu0 %v471
        %759 = vmatmul.mubr.bf16.gmra.mxu0 %v470
        %v760 = vpop.f32.mrf.mxu0
        %v761 = vadd.f32 %v373, %v760
        %v762 = vpop.f32.mrf.mxu0
        %v763 = vpop.f32.mrf.mxu0
        %v764 = vadd.f32 %v373, %v763
        %v765 = vpop.f32.mrf.mxu0
        %766 = vmatprep.mubr.bf16.mxu0 %v475
        %767 = vmatmul.mubr.bf16.gmra.mxu0 %v474
        %v768 = vpop.f32.mrf.mxu0
        %v769 = vadd.f32 %v373, %v768
        %v770 = vpop.f32.mrf.mxu0
        %v771 = vpop.f32.mrf.mxu0
        %v772 = vadd.f32 %v373, %v771
        %v773 = vpop.f32.mrf.mxu0
        %774 = vmatprep.mubr.bf16.mxu0 %v479
        %775 = vmatmul.mubr.bf16.gmra.mxu0 %v478
        %v776 = vpop.f32.mrf.mxu0
        %v777 = vadd.f32 %v373, %v776
        %v778 = vpop.f32.mrf.mxu0
        %v779 = vpop.f32.mrf.mxu0
        %v780 = vadd.f32 %v373, %v779
        %v781 = vpop.f32.mrf.mxu0
        %782 = vmatprep.mubr.bf16.mxu0 %v483
        %783 = vmatmul.mubr.bf16.gmra.mxu0 %v482
        %v784 = vpop.f32.mrf.mxu0
        %v785 = vadd.f32 %v373, %v784
        %v786 = vpop.f32.mrf.mxu0
        %v787 = vpop.f32.mrf.mxu0
        %v788 = vadd.f32 %v373, %v787
        %v789 = vpop.f32.mrf.mxu0
        %790 = vmatprep.mubr.bf16.mxu0 %v487
        %791 = vmatmul.mubr.bf16.gmra.mxu0 %v486
        %v792 = vpop.f32.mrf.mxu0
        %v793 = vadd.f32 %v373, %v792
        %v794 = vpop.f32.mrf.mxu0
        %v795 = vpop.f32.mrf.mxu0
        %v796 = vadd.f32 %v373, %v795
        %v797 = vpop.f32.mrf.mxu0
        %798 = vmatprep.mubr.bf16.mxu0 %v491
        %799 = vmatmul.mubr.bf16.gmra.mxu0 %v490
        %v800 = vpop.f32.mrf.mxu0
        %v801 = vadd.f32 %v373, %v800
        %v802 = vpop.f32.mrf.mxu0
        %v803 = vpop.f32.mrf.mxu0
        %v804 = vadd.f32 %v373, %v803
        %v805 = vpop.f32.mrf.mxu0
        %806 = vmatprep.mubr.bf16.mxu0 %v495
        %807 = vmatmul.mubr.bf16.gmra.mxu0 %v494
        %v808 = vpop.f32.mrf.mxu0
        %v809 = vadd.f32 %v373, %v808
        %v810 = vpop.f32.mrf.mxu0
        %v811 = vpop.f32.mrf.mxu0
        %v812 = vadd.f32 %v373, %v811
        %v813 = vpop.f32.mrf.mxu0
        %814 = vmatprep.mubr.bf16.mxu0 %v499
        %815 = vmatmul.mubr.bf16.gmra.mxu0 %v498
        %v816 = vpop.f32.mrf.mxu0
        %v817 = vadd.f32 %v373, %v816
        %v818 = vpop.f32.mrf.mxu0
        %v819 = vpop.f32.mrf.mxu0
        %v820 = vadd.f32 %v373, %v819
        %v821 = vpop.f32.mrf.mxu0
        %822 = vdwg.mxu0
        %823 = vmatprep.subr.bf16.mxu0 0
        %824 = vmatpush1.bf16.msra.mxu0 %v685
        %825 = vmatprep.subr.bf16.mxu0 0
        %826 = vmatpush1.bf16.msra.mxu0 %v684
        %827 = vmatprep.subr.bf16.mxu0 0
        %828 = vmatpush1.bf16.msra.mxu0 %v683
        %829 = vmatprep.subr.bf16.mxu0 0
        %830 = vmatpush1.bf16.msra.mxu0 %v682
        %831 = vmatprep.subr.bf16.mxu0 0
        %832 = vmatpush1.bf16.msra.mxu0 %v681
        %833 = vmatprep.subr.bf16.mxu0 0
        %834 = vmatpush1.bf16.msra.mxu0 %v680
        %835 = vmatprep.subr.bf16.mxu0 0
        %836 = vmatpush1.bf16.msra.mxu0 %v679
        %837 = vmatprep.subr.bf16.mxu0 0
        %838 = vmatpush1.bf16.msra.mxu0 %v678
        %839 = vmatprep.subr.bf16.mxu0 0
        %840 = vmatpush2.bf16.msra.mxu0 %v693
        %841 = vmatprep.subr.bf16.mxu0 0
        %842 = vmatpush2.bf16.msra.mxu0 %v692
        %843 = vmatprep.subr.bf16.mxu0 0
        %844 = vmatpush2.bf16.msra.mxu0 %v691
        %845 = vmatprep.subr.bf16.mxu0 0
        %846 = vmatpush2.bf16.msra.mxu0 %v690
        %847 = vmatprep.subr.bf16.mxu0 0
        %848 = vmatpush2.bf16.msra.mxu0 %v689
        %849 = vmatprep.subr.bf16.mxu0 0
        %850 = vmatpush2.bf16.msra.mxu0 %v688
        %851 = vmatprep.subr.bf16.mxu0 0
        %852 = vmatpush2.bf16.msra.mxu0 %v687
        %853 = vmatprep.subr.bf16.mxu0 0
        %854 = vmatpush2.bf16.msra.mxu0 %v686
        %855 = vmatprep.mubr.bf16.mxu0 %v473
        %856 = vmatmul.mubr.bf16.gmra.mxu0 %v472
        %v857 = vpop.f32.mrf.mxu0
        %v858 = vadd.f32 %v761, %v857
        %v859 = vpop.f32.mrf.mxu0
        %v860 = vpop.f32.mrf.mxu0
        %v861 = vadd.f32 %v764, %v860
        %v862 = vpop.f32.mrf.mxu0
        %863 = vmatprep.mubr.bf16.mxu0 %v477
        %864 = vmatmul.mubr.bf16.gmra.mxu0 %v476
        %v865 = vpop.f32.mrf.mxu0
        %v866 = vadd.f32 %v769, %v865
        %v867 = vpop.f32.mrf.mxu0
        %v868 = vpop.f32.mrf.mxu0
        %v869 = vadd.f32 %v772, %v868
        %v870 = vpop.f32.mrf.mxu0
        %871 = vmatprep.mubr.bf16.mxu0 %v481
        %872 = vmatmul.mubr.bf16.gmra.mxu0 %v480
        %v873 = vpop.f32.mrf.mxu0
        %v874 = vadd.f32 %v777, %v873
        %v875 = vpop.f32.mrf.mxu0
        %v876 = vpop.f32.mrf.mxu0
        %v877 = vadd.f32 %v780, %v876
        %v878 = vpop.f32.mrf.mxu0
        %879 = vmatprep.mubr.bf16.mxu0 %v485
        %880 = vmatmul.mubr.bf16.gmra.mxu0 %v484
        %v881 = vpop.f32.mrf.mxu0
        %v882 = vadd.f32 %v785, %v881
        %v883 = vpop.f32.mrf.mxu0
        %v884 = vpop.f32.mrf.mxu0
        %v885 = vadd.f32 %v788, %v884
        %v886 = vpop.f32.mrf.mxu0
        %887 = vmatprep.mubr.bf16.mxu0 %v489
        %888 = vmatmul.mubr.bf16.gmra.mxu0 %v488
        %v889 = vpop.f32.mrf.mxu0
        %v890 = vadd.f32 %v793, %v889
        %v891 = vpop.f32.mrf.mxu0
        %v892 = vpop.f32.mrf.mxu0
        %v893 = vadd.f32 %v796, %v892
        %v894 = vpop.f32.mrf.mxu0
        %895 = vmatprep.mubr.bf16.mxu0 %v493
        %896 = vmatmul.mubr.bf16.gmra.mxu0 %v492
        %v897 = vpop.f32.mrf.mxu0
        %v898 = vadd.f32 %v801, %v897
        %v899 = vpop.f32.mrf.mxu0
        %v900 = vpop.f32.mrf.mxu0
        %v901 = vadd.f32 %v804, %v900
        %v902 = vpop.f32.mrf.mxu0
        %903 = vmatprep.mubr.bf16.mxu0 %v497
        %904 = vmatmul.mubr.bf16.gmra.mxu0 %v496
        %v905 = vpop.f32.mrf.mxu0
        %v906 = vadd.f32 %v809, %v905
        %v907 = vpop.f32.mrf.mxu0
        %v908 = vpop.f32.mrf.mxu0
        %v909 = vadd.f32 %v812, %v908
        %v910 = vpop.f32.mrf.mxu0
        %911 = vmatprep.mubr.bf16.mxu0 %v501
        %912 = vmatmul.mubr.bf16.gmra.mxu0 %v500
        %v913 = vpop.f32.mrf.mxu0
        %v914 = vadd.f32 %v817, %v913
        %v915 = vpop.f32.mrf.mxu0
        %v916 = vpop.f32.mrf.mxu0
        %v917 = vadd.f32 %v820, %v916
        %v918 = vpop.f32.mrf.mxu0
        %919 = vdwg.mxu0
        %v920 = vld [vmem:[%s239] sm:$0xff]
        %v921 = vld [vmem:[%s239 + $0x8] sm:$0xff]
        %v922 = vld [vmem:[%s239 + $0x10] sm:$0xff]
        %v923 = vld [vmem:[%s239 + $0x18] sm:$0xff]
        %v924 = vld [vmem:[%s239 + $0x20] sm:$0xff]
        %v925 = vld [vmem:[%s239 + $0x28] sm:$0xff]
        %v926 = vld [vmem:[%s239 + $0x30] sm:$0xff]
        %v927 = vld [vmem:[%s239 + $0x38] sm:$0xff]
        %v928 = vld [vmem:[%s239 + $0x40] sm:$0xff]
        %v929 = vld [vmem:[%s239 + $0x48] sm:$0xff]
        %v930 = vld [vmem:[%s239 + $0x50] sm:$0xff]
        %v931 = vld [vmem:[%s239 + $0x58] sm:$0xff]
        %v932 = vld [vmem:[%s239 + $0x60] sm:$0xff]
        %v933 = vld [vmem:[%s239 + $0x68] sm:$0xff]
        %v934 = vld [vmem:[%s239 + $0x70] sm:$0xff]
        %v935 = vld [vmem:[%s239 + $0x78] sm:$0xff]
        %v936 = vadd.f32 %v858, %v920
        %v937 = vadd.f32 %v861, %v921
        %v938 = vadd.f32 %v866, %v922
        %v939 = vadd.f32 %v869, %v923
        %v940 = vadd.f32 %v874, %v924
        %v941 = vadd.f32 %v877, %v925
        %v942 = vadd.f32 %v882, %v926
        %v943 = vadd.f32 %v885, %v927
        %v944 = vadd.f32 %v890, %v928
        %v945 = vadd.f32 %v893, %v929
        %v946 = vadd.f32 %v898, %v930
        %v947 = vadd.f32 %v901, %v931
        %v948 = vadd.f32 %v906, %v932
        %v949 = vadd.f32 %v909, %v933
        %v950 = vadd.f32 %v914, %v934
        %v951 = vadd.f32 %v917, %v935
        %952 = vadd.xlane.f32.xlu0 %v936
        %v953 = vpop.xlane.xlu0 %952
        %954 = vadd.xlane.f32.xlu0 %v937
        %v955 = vpop.xlane.xlu0 %954
        %956 = vadd.xlane.f32.xlu0 %v938
        %v957 = vpop.xlane.xlu0 %956
        %958 = vadd.xlane.f32.xlu0 %v939
        %v959 = vpop.xlane.xlu0 %958
        %960 = vadd.xlane.f32.xlu0 %v940
        %v961 = vpop.xlane.xlu0 %960
        %962 = vadd.xlane.f32.xlu0 %v941
        %v963 = vpop.xlane.xlu0 %962
        %964 = vadd.xlane.f32.xlu0 %v942
        %v965 = vpop.xlane.xlu0 %964
        %966 = vadd.xlane.f32.xlu0 %v943
        %v967 = vpop.xlane.xlu0 %966
        %968 = vadd.xlane.f32.xlu0 %v944
        %v969 = vpop.xlane.xlu0 %968
        %970 = vadd.xlane.f32.xlu0 %v945
        %v971 = vpop.xlane.xlu0 %970
        %972 = vadd.xlane.f32.xlu0 %v946
        %v973 = vpop.xlane.xlu0 %972
        %974 = vadd.xlane.f32.xlu0 %v947
        %v975 = vpop.xlane.xlu0 %974
        %976 = vadd.xlane.f32.xlu0 %v948
        %v977 = vpop.xlane.xlu0 %976
        %978 = vadd.xlane.f32.xlu0 %v949
        %v979 = vpop.xlane.xlu0 %978
        %980 = vadd.xlane.f32.xlu0 %v950
        %v981 = vpop.xlane.xlu0 %980
        %982 = vadd.xlane.f32.xlu0 %v951
        %v983 = vpop.xlane.xlu0 %982
        %v984 = vrcp.pop 128.0
        %v985 = vmul.f32 %v953, %v984
        %v986 = vmul.f32 %v955, %v984
        %v987 = vmul.f32 %v957, %v984
        %v988 = vmul.f32 %v959, %v984
        %v989 = vmul.f32 %v961, %v984
        %v990 = vmul.f32 %v963, %v984
        %v991 = vmul.f32 %v965, %v984
        %v992 = vmul.f32 %v967, %v984
        %v993 = vmul.f32 %v969, %v984
        %v994 = vmul.f32 %v971, %v984
        %v995 = vmul.f32 %v973, %v984
        %v996 = vmul.f32 %v975, %v984
        %v997 = vmul.f32 %v977, %v984
        %v998 = vmul.f32 %v979, %v984
        %v999 = vmul.f32 %v981, %v984
        %v1000 = vmul.f32 %v983, %v984
        %v1001 = vmul.f32 %v936, %v936
        %v1002 = vmul.f32 %v937, %v937
        %v1003 = vmul.f32 %v938, %v938
        %v1004 = vmul.f32 %v939, %v939
        %v1005 = vmul.f32 %v940, %v940
        %v1006 = vmul.f32 %v941, %v941
        %v1007 = vmul.f32 %v942, %v942
        %v1008 = vmul.f32 %v943, %v943
        %v1009 = vmul.f32 %v944, %v944
        %v1010 = vmul.f32 %v945, %v945
        %v1011 = vmul.f32 %v946, %v946
        %v1012 = vmul.f32 %v947, %v947
        %v1013 = vmul.f32 %v948, %v948
        %v1014 = vmul.f32 %v949, %v949
        %v1015 = vmul.f32 %v950, %v950
        %v1016 = vmul.f32 %v951, %v951
        %1017 = vadd.xlane.f32.xlu0 %v1001
        %v1018 = vpop.xlane.xlu0 %1017
        %1019 = vadd.xlane.f32.xlu0 %v1002
        %v1020 = vpop.xlane.xlu0 %1019
        %1021 = vadd.xlane.f32.xlu0 %v1003
        %v1022 = vpop.xlane.xlu0 %1021
        %1023 = vadd.xlane.f32.xlu0 %v1004
        %v1024 = vpop.xlane.xlu0 %1023
        %1025 = vadd.xlane.f32.xlu0 %v1005
        %v1026 = vpop.xlane.xlu0 %1025
        %1027 = vadd.xlane.f32.xlu0 %v1006
        %v1028 = vpop.xlane.xlu0 %1027
        %1029 = vadd.xlane.f32.xlu0 %v1007
        %v1030 = vpop.xlane.xlu0 %1029
        %1031 = vadd.xlane.f32.xlu0 %v1008
        %v1032 = vpop.xlane.xlu0 %1031
        %1033 = vadd.xlane.f32.xlu0 %v1009
        %v1034 = vpop.xlane.xlu0 %1033
        %1035 = vadd.xlane.f32.xlu0 %v1010
        %v1036 = vpop.xlane.xlu0 %1035
        %1037 = vadd.xlane.f32.xlu0 %v1011
        %v1038 = vpop.xlane.xlu0 %1037
        %1039 = vadd.xlane.f32.xlu0 %v1012
        %v1040 = vpop.xlane.xlu0 %1039
        %1041 = vadd.xlane.f32.xlu0 %v1013
        %v1042 = vpop.xlane.xlu0 %1041
        %1043 = vadd.xlane.f32.xlu0 %v1014
        %v1044 = vpop.xlane.xlu0 %1043
        %1045 = vadd.xlane.f32.xlu0 %v1015
        %v1046 = vpop.xlane.xlu0 %1045
        %1047 = vadd.xlane.f32.xlu0 %v1016
        %v1048 = vpop.xlane.xlu0 %1047
        %v1049 = vmul.f32 %v1018, %v984
        %v1050 = vmul.f32 %v1020, %v984
        %v1051 = vmul.f32 %v1022, %v984
        %v1052 = vmul.f32 %v1024, %v984
        %v1053 = vmul.f32 %v1026, %v984
        %v1054 = vmul.f32 %v1028, %v984
        %v1055 = vmul.f32 %v1030, %v984
        %v1056 = vmul.f32 %v1032, %v984
        %v1057 = vmul.f32 %v1034, %v984
        %v1058 = vmul.f32 %v1036, %v984
        %v1059 = vmul.f32 %v1038, %v984
        %v1060 = vmul.f32 %v1040, %v984
        %v1061 = vmul.f32 %v1042, %v984
        %v1062 = vmul.f32 %v1044, %v984
        %v1063 = vmul.f32 %v1046, %v984
        %v1064 = vmul.f32 %v1048, %v984
        %v1065 = vmul.f32 %v985, %v985
        %v1066 = vmul.f32 %v986, %v986
        %v1067 = vmul.f32 %v987, %v987
        %v1068 = vmul.f32 %v988, %v988
        %v1069 = vmul.f32 %v989, %v989
        %v1070 = vmul.f32 %v990, %v990
        %v1071 = vmul.f32 %v991, %v991
        %v1072 = vmul.f32 %v992, %v992
        %v1073 = vmul.f32 %v993, %v993
        %v1074 = vmul.f32 %v994, %v994
        %v1075 = vmul.f32 %v995, %v995
        %v1076 = vmul.f32 %v996, %v996
        %v1077 = vmul.f32 %v997, %v997
        %v1078 = vmul.f32 %v998, %v998
        %v1079 = vmul.f32 %v999, %v999
        %v1080 = vmul.f32 %v1000, %v1000
        %v1081 = vsub.f32 %v1049, %v1065
        %v1082 = vsub.f32 %v1050, %v1066
        %v1083 = vsub.f32 %v1051, %v1067
        %v1084 = vsub.f32 %v1052, %v1068
        %v1085 = vsub.f32 %v1053, %v1069
        %v1086 = vsub.f32 %v1054, %v1070
        %v1087 = vsub.f32 %v1055, %v1071
        %v1088 = vsub.f32 %v1056, %v1072
        %v1089 = vsub.f32 %v1057, %v1073
        %v1090 = vsub.f32 %v1058, %v1074
        %v1091 = vsub.f32 %v1059, %v1075
        %v1092 = vsub.f32 %v1060, %v1076
        %v1093 = vsub.f32 %v1061, %v1077
        %v1094 = vsub.f32 %v1062, %v1078
        %v1095 = vsub.f32 %v1063, %v1079
        %v1096 = vsub.f32 %v1064, %v1080
        %v1097 = vadd.f32 %v1081, 1e-12
        %v1098 = vadd.f32 %v1082, 1e-12
        %v1099 = vadd.f32 %v1083, 1e-12
        %v1100 = vadd.f32 %v1084, 1e-12
        %v1101 = vadd.f32 %v1085, 1e-12
        %v1102 = vadd.f32 %v1086, 1e-12
        %v1103 = vadd.f32 %v1087, 1e-12
        %v1104 = vadd.f32 %v1088, 1e-12
        %v1105 = vadd.f32 %v1089, 1e-12
        %v1106 = vadd.f32 %v1090, 1e-12
        %v1107 = vadd.f32 %v1091, 1e-12
        %v1108 = vadd.f32 %v1092, 1e-12
        %v1109 = vadd.f32 %v1093, 1e-12
        %v1110 = vadd.f32 %v1094, 1e-12
        %v1111 = vadd.f32 %v1095, 1e-12
        %v1112 = vadd.f32 %v1096, 1e-12
        %v1113 = vrsqrt.pop %v1097
        %v1114 = vrsqrt.pop %v1098
        %v1115 = vrsqrt.pop %v1099
        %v1116 = vrsqrt.pop %v1100
        %v1117 = vrsqrt.pop %v1101
        %v1118 = vrsqrt.pop %v1102
        %v1119 = vrsqrt.pop %v1103
        %v1120 = vrsqrt.pop %v1104
        %v1121 = vrsqrt.pop %v1105
        %v1122 = vrsqrt.pop %v1106
        %v1123 = vrsqrt.pop %v1107
        %v1124 = vrsqrt.pop %v1108
        %v1125 = vrsqrt.pop %v1109
        %v1126 = vrsqrt.pop %v1110
        %v1127 = vrsqrt.pop %v1111
        %v1128 = vrsqrt.pop %v1112
        %v1129 = vsub.f32 %v936, %v985
        %v1130 = vsub.f32 %v937, %v986
        %v1131 = vsub.f32 %v938, %v987
        %v1132 = vsub.f32 %v939, %v988
        %v1133 = vsub.f32 %v940, %v989
        %v1134 = vsub.f32 %v941, %v990
        %v1135 = vsub.f32 %v942, %v991
        %v1136 = vsub.f32 %v943, %v992
        %v1137 = vsub.f32 %v944, %v993
        %v1138 = vsub.f32 %v945, %v994
        %v1139 = vsub.f32 %v946, %v995
        %v1140 = vsub.f32 %v947, %v996
        %v1141 = vsub.f32 %v948, %v997
        %v1142 = vsub.f32 %v949, %v998
        %v1143 = vsub.f32 %v950, %v999
        %v1144 = vsub.f32 %v951, %v1000
        %v1145 = vmul.f32 %v1129, %v1113
        %v1146 = vmul.f32 %v1130, %v1114
        %v1147 = vmul.f32 %v1131, %v1115
        %v1148 = vmul.f32 %v1132, %v1116
        %v1149 = vmul.f32 %v1133, %v1117
        %v1150 = vmul.f32 %v1134, %v1118
        %v1151 = vmul.f32 %v1135, %v1119
        %v1152 = vmul.f32 %v1136, %v1120
        %v1153 = vmul.f32 %v1137, %v1121
        %v1154 = vmul.f32 %v1138, %v1122
        %v1155 = vmul.f32 %v1139, %v1123
        %v1156 = vmul.f32 %v1140, %v1124
        %v1157 = vmul.f32 %v1141, %v1125
        %v1158 = vmul.f32 %v1142, %v1126
        %v1159 = vmul.f32 %v1143, %v1127
        %v1160 = vmul.f32 %v1144, %v1128
        %v1161 = vlaneseq
        %v1162 = vshrl.u32 %v1161, 7
        %v1163 = vsub.s32 1, %v1162
        %v1164 = vrot.slane %v369, %v1163
        %v1165 = vmul.f32 %v1145, %v1164
        %v1166 = vmul.f32 %v1146, %v1164
        %v1167 = vmul.f32 %v1147, %v1164
        %v1168 = vmul.f32 %v1148, %v1164
        %v1169 = vmul.f32 %v1149, %v1164
        %v1170 = vmul.f32 %v1150, %v1164
        %v1171 = vmul.f32 %v1151, %v1164
        %v1172 = vmul.f32 %v1152, %v1164
        %v1173 = vmul.f32 %v1153, %v1164
        %v1174 = vmul.f32 %v1154, %v1164
        %v1175 = vmul.f32 %v1155, %v1164
        %v1176 = vmul.f32 %v1156, %v1164
        %v1177 = vmul.f32 %v1157, %v1164
        %v1178 = vmul.f32 %v1158, %v1164
        %v1179 = vmul.f32 %v1159, %v1164
        %v1180 = vmul.f32 %v1160, %v1164
        %v1181 = vlaneseq
        %v1182 = vshrl.u32 %v1181, 7
        %v1183 = vsub.s32 2, %v1182
        %v1184 = vrot.slane %v369, %v1183
        %v1185 = vadd.f32 %v1165, %v1184
        %v1186 = vadd.f32 %v1166, %v1184
        %v1187 = vadd.f32 %v1167, %v1184
        %v1188 = vadd.f32 %v1168, %v1184
        %v1189 = vadd.f32 %v1169, %v1184
        %v1190 = vadd.f32 %v1170, %v1184
        %v1191 = vadd.f32 %v1171, %v1184
        %v1192 = vadd.f32 %v1172, %v1184
        %v1193 = vadd.f32 %v1173, %v1184
        %v1194 = vadd.f32 %v1174, %v1184
        %v1195 = vadd.f32 %v1175, %v1184
        %v1196 = vadd.f32 %v1176, %v1184
        %v1197 = vadd.f32 %v1177, %v1184
        %v1198 = vadd.f32 %v1178, %v1184
        %v1199 = vadd.f32 %v1179, %v1184
        %v1200 = vadd.f32 %v1180, %v1184
        %1201 = vst [vmem:[%s268] sm:$0xff] %v1185
        %1202 = vst [vmem:[%s268 + $0x8] sm:$0xff] %v1186
        %1203 = vst [vmem:[%s268 + $0x10] sm:$0xff] %v1187
        %1204 = vst [vmem:[%s268 + $0x18] sm:$0xff] %v1188
        %1205 = vst [vmem:[%s268 + $0x20] sm:$0xff] %v1189
        %1206 = vst [vmem:[%s268 + $0x28] sm:$0xff] %v1190
        %1207 = vst [vmem:[%s268 + $0x30] sm:$0xff] %v1191
        %1208 = vst [vmem:[%s268 + $0x38] sm:$0xff] %v1192
        %1209 = vst [vmem:[%s268 + $0x40] sm:$0xff] %v1193
        %1210 = vst [vmem:[%s268 + $0x48] sm:$0xff] %v1194
        %1211 = vst [vmem:[%s268 + $0x50] sm:$0xff] %v1195
        %1212 = vst [vmem:[%s268 + $0x58] sm:$0xff] %v1196
        %1213 = vst [vmem:[%s268 + $0x60] sm:$0xff] %v1197
        %1214 = vst [vmem:[%s268 + $0x68] sm:$0xff] %v1198
        %1215 = vst [vmem:[%s268 + $0x70] sm:$0xff] %v1199
        %1216 = vst [vmem:[%s268 + $0x78] sm:$0xff] %v1200
        %s1217 = sand.u32 %s124, 1
        %s1218 = scalar_lea.sflag [#allocation4], %s1217
        %s1219 = sand.u32 %s124, 1
        %s1220 = smul.addr %s1219, 128
        %s1221 = scalar_lea.vmem [#allocation8], %s1220
        // Predicated region
        $region49: #{tpu_custom_call.1} parent=35 // pred_check
          %p1222 = pneg %p134
        $region50: #{tpu_custom_call.1} parent=35 // pred_check_branch
          %1224 = sbr.rel (%p1222) target = $region52
        $region51: #{tpu_custom_call.1} parent=35 // pred_region
          %s1225 = smul.u32 16, %s22
          %s1227 = ssub.s32 2048, 2048
          %1228 = vsyncadd %s1218, %s1227
          %s1229 = smul.addr %s1225, 128
          %s1230 = scalar_lea.hbm %s4, %s1229
          %s1231 = sshll.u32 %s1221, 4
          %s1232 = int_to_ptr.vmem [resolvable:$true] %s1231
          %1237 = dma.vmem_to_hbm [thread:$0]  %s1232, 2048, %s1230, %s1218, 128, 128, 8
        $region52: #{tpu_custom_call.1} parent=35 // pred_fallthru
          _
      $region36: #{tpu_custom_call.1} parent=5 // pred_fallthru
        _
      %p1238 = scmp.le.s32.totalorder 2, %s17
      // Predicated region
      $region53: #{tpu_custom_call.1} parent=5 // pred_check
        %p1239 = pneg %p1238
      $region54: #{tpu_custom_call.1} parent=5 // pred_check_branch
        %1241 = sbr.rel (%p1239) target = $region56
      $region55: #{tpu_custom_call.1} parent=5 // pred_region
        %s1242 = ssub.s32 %s17, 2
        // Predicated region
        $region57: #{tpu_custom_call.1} parent=55 // pred_check
          %p1243 = pneg %p140
        $region58: #{tpu_custom_call.1} parent=55 // pred_check_branch
          %1245 = sbr.rel (%p1243) target = $region60
        $region59: #{tpu_custom_call.1} parent=55 // pred_region
          %s1246 = sand.u32 %s125, 1
          %s1247 = scalar_lea.sflag [#allocation4], %s1246
          %s1248 = sand.u32 %s125, 1
          %s1249 = smul.addr %s1248, 128
          %s1250 = scalar_lea.vmem [#allocation8], %s1249
          %1251 = dma.done %s1247, 2048
        $region60: #{tpu_custom_call.1} parent=55 // pred_fallthru
          _
      $region56: #{tpu_custom_call.1} parent=5 // pred_fallthru
        _
    $region6: #{tpu_custom_call.1} parent=1 // loop_footer
      %s21 = sadd.s32 1, %s17
    $region7: #{tpu_custom_call.1} parent=1 // loop_footer_branch
      %16 = sbr.rel target = $region3
    $region8: #{tpu_custom_call.1} parent=1 // loop_exit
      _
    %1252 = vsyncpa [#allocation3], 1
    %s1253 = scalar_lea.sflag [#allocation3], 1
    %1254 = vsyncpa %s1253, 1
    %1255 = vsyncpa [#allocation6], 1
    %1256 = vsyncpa [#allocation4], 1
    %s1257 = scalar_lea.sflag [#allocation4], 1
    %1258 = vsyncpa %s1257, 1

</llo_original>
